<compile_context>
chip_gen: v7x
topology: tpu7x:2x2x1
jax: 0.10.0
libtpu: 0.0.40
codegen_flags: <defaults>
</compile_context>

<pallas_src>
import functools

import numpy as np
import jax
import jax.numpy as jnp
from jax.experimental import pallas as pl
from jax.experimental.pallas import tpu as pltpu


def _round_up(a: int, b: int) -> int:
    return ((a + b - 1) // b) * b


def _block_vmem_bytes(rows: int, cols: int, itemsize: int) -> int:
    # VMEM blocks are laid out in (8, 128) tiles; a (rows, 1) f32 block still
    # occupies 128 lanes.  Conservative for sub-32-bit dtypes.
    return _round_up(max(rows, 1), 8) * _round_up(max(cols, 1), 128) * itemsize


def _working_set_bytes(tm: int, tn: int, out_itemsize: int) -> int:
    out_tile = _block_vmem_bytes(tm, tn, out_itemsize)
    x_tile = _block_vmem_bytes(tm, 1, 4)          # lane-pads to 128 lanes
    param_tiles = 2 * _block_vmem_bytes(1, tn, 4)  # Mu and -1/Sigma
    return 2 * (out_tile + x_tile + param_tiles)   # double-buffered pipeline


def _vmem_budget_bytes() -> int:
    # Generation-aware cap for the double-buffered working set.
    try:
        cap = pltpu.get_tpu_info().vmem_capacity_bytes
    except Exception:
        cap = 64 << 20  # conservative fallback: v7x per-TC VMEM
    return min(24 << 20, (cap * 3) // 8)


def _rbf_kernel(x_ref, mu_ref, nis_ref, o_ref):
    # x_ref:   (TM, 1)   sample coordinates for this row tile
    # mu_ref:  (1, TN)   RBF centers (resident per column tile)
    # nis_ref: (1, TN)   precomputed -1/Sigma
    # o_ref:   (TM, TN)  output tile
    diff = x_ref[...] - mu_ref[...]                       # broadcast -> (TM, TN)
    # Only the exp hits the EUP; no divide / negate per element.
    o_ref[...] = jnp.exp(diff * diff * nis_ref[...]).astype(o_ref.dtype)


def rbf_forward(x, mu, sigma, *, tile_m: int = 1024, tile_n: int = 2048,
                out_dtype=jnp.float32):
    """x: (N, 1) or (N,); mu: (Nk,); sigma: (Nk,) or broadcastable scalar.
    Returns (N, Nk) = exp(-(x - mu)^2 / sigma), computed in f32, stored as out_dtype."""
    x = jnp.asarray(x, jnp.float32)
    if x.ndim == 1:
        x = x[:, None]
    N = x.shape[0]

    mu = jnp.asarray(mu, jnp.float32).reshape(1, -1)
    Nk = mu.shape[1]
    sigma = jnp.broadcast_to(jnp.asarray(sigma, jnp.float32).reshape(-1), (Nk,))
    neg_inv_sigma = (-1.0 / sigma).reshape(1, Nk)

    out_itemsize = int(np.dtype(out_dtype).itemsize)

    # ---- Column (Nk) tiling: either the full width (always legal — equals the
    # array dim) or a 128-multiple tile with a masked ragged edge. ----
    if Nk <= tile_n:
        tn = Nk
    else:
        tn = max(128, _round_up(tile_n, 128))

    # ---- Row (N) tiling: multiples of 8, capped by N and by the VMEM budget. ----
    tm = max(8, _round_up(tile_m, 8))
    tm = min(tm, _round_up(N, 8))

    budget = _vmem_budget_bytes()
    while _working_set_bytes(tm, tn, out_itemsize) > budget and (tm > 8 or tn > 128):
        if tm > 8:
            tm = max(8, _round_up(tm // 2, 8))
        else:
            tn = max(128, _round_up(tn // 2, 128))

    grid_m = pl.cdiv(N, tm)
    grid_n = pl.cdiv(Nk, tn)

    # Only split rows when the whole problem is a single block (keeps both v7x
    # TensorCores busy); single-TC v5e/v6e keep the big tile otherwise.
    if grid_m * grid_n == 1 and N >= 16:
        tm = max(8, _round_up(pl.cdiv(N, 2), 8))
        grid_m = pl.cdiv(N, tm)

    out = pl.pallas_call(
        _rbf_kernel,
        out_shape=jax.ShapeDtypeStruct((N, Nk), out_dtype),
        grid_spec=pltpu.PrefetchScalarGridSpec(
            num_scalar_prefetch=0,
            grid=(grid_m, grid_n),
            in_specs=[
                pl.BlockSpec((tm, 1), lambda i, j: (i, 0)),    # x rows
                pl.BlockSpec((1, tn), lambda i, j: (0, j)),    # Mu
                pl.BlockSpec((1, tn), lambda i, j: (0, j)),    # -1/Sigma
            ],
            out_specs=pl.BlockSpec((tm, tn), lambda i, j: (i, j)),
        ),
        compiler_params=pltpu.CompilerParams(
            dimension_semantics=("parallel", "parallel"),
            # Explicit limit so v5e's 16 MiB scoped default doesn't reject the
            # larger tiles; 32 MiB is <= the v6e/v7x defaults and well under
            # physical VMEM on every generation.
            vmem_limit_bytes=32 << 20,
        ),
    )(x, mu, neg_inv_sigma)

    return out


if __name__ == "__main__":
    # Deterministic parameter setup (mirrors RBFLayer.__init__ with scalar xmin/xmax).
    xmin, xmax = 0.5, 2.0          # positive so Sigma > 0 (valid RBF widths)
    Nk = 96                        # NOT a multiple of 128 (exercises ragged column tile)
    N = 100                        # awkward N (exercises ragged row tile)

    key = jax.random.PRNGKey(0)
    k_mu, k_sigma, k_x = jax.random.split(key, 3)

    # Mu = rand(Nk) * (xmax - xmin) + xmin ; Sigma likewise (as in __init__ defaults).
    Mu = jax.random.uniform(k_mu, (Nk,), dtype=jnp.float32) * (xmax - xmin) + xmin
    Sigma = jax.random.uniform(k_sigma, (Nk,), dtype=jnp.float32) * (xmax - xmin) + xmin

    # Input samples in [xmin, xmax], shape (N, 1) like the PyTorch usage.
    x = jax.random.uniform(k_x, (N, 1), dtype=jnp.float32) * (xmax - xmin) + xmin

    # jit so the -1/Sigma prep and broadcasts are folded/fused into one executable.
    rbf = jax.jit(rbf_forward)
    out = jax.block_until_ready(rbf(x, Mu, Sigma))

    # Reference check in plain JAX (same broadcasting semantics as torch).
    ref = jnp.exp(-jnp.square(x - Mu[None, :]) / Sigma[None, :])
    assert out.shape == (N, Nk) and out.dtype == jnp.float32
    assert jnp.allclose(out, ref, atol=1e-6, rtol=1e-5), "f32 mismatch vs reference"

    # bf16 output option (halves HBM writeback traffic; compute stays f32).
    rbf_bf16 = jax.jit(functools.partial(rbf_forward, out_dtype=jnp.bfloat16))
    out_bf16 = jax.block_until_ready(rbf_bf16(x, Mu, Sigma))
    assert out_bf16.shape == (N, Nk) and out_bf16.dtype == jnp.bfloat16
    assert jnp.allclose(out_bf16.astype(jnp.float32), ref, atol=2e-2, rtol=2e-2), \
        "bf16 mismatch vs reference"

    print("KERNEL_OK")
</pallas_src>

<mosaic_0001>
module attributes {stable_mosaic.version = 11 : i64} {
  func.func @_rbf_kernel(%arg0: i32, %arg1: i32, %arg2: memref<56x1xf32, #tpu.memory_space<vmem>>, %arg3: memref<1x96xf32, #tpu.memory_space<vmem>>, %arg4: memref<1x96xf32, #tpu.memory_space<vmem>>, %arg5: memref<56x96xf32, #tpu.memory_space<vmem>>) attributes {dimension_semantics = [#tpu.dimension_semantics<parallel>, #tpu.dimension_semantics<parallel>], iteration_bounds = array<i64: 2, 1>, scalar_prefetch = 0 : i64, scratch_operands = 0 : i64, tpu.core_type = #tpu.core_type<tc>, window_params = [{transform_indices = @transform_0, window_bounds = array<i64: 56, 1>}, {transform_indices = @transform_1, window_bounds = array<i64: 1, 96>}, {transform_indices = @transform_2, window_bounds = array<i64: 1, 96>}, {transform_indices = @transform_3, window_bounds = array<i64: 56, 96>}]} {
    %c0 = arith.constant 0 : index
    %c0_0 = arith.constant 0 : index
    %0 = vector.load %arg2[%c0, %c0_0] : memref<56x1xf32, #tpu.memory_space<vmem>>, vector<56x1xf32>
    %c0_1 = arith.constant 0 : index
    %c0_2 = arith.constant 0 : index
    %1 = vector.load %arg3[%c0_1, %c0_2] : memref<1x96xf32, #tpu.memory_space<vmem>>, vector<1x96xf32>
    %2 = vector.broadcast %0 : vector<56x1xf32> to vector<56x96xf32>
    %3 = vector.broadcast %1 : vector<1x96xf32> to vector<56x96xf32>
    %4 = arith.subf %2, %3 : vector<56x96xf32>
    %5 = arith.mulf %4, %4 : vector<56x96xf32>
    %c0_3 = arith.constant 0 : index
    %c0_4 = arith.constant 0 : index
    %6 = vector.load %arg4[%c0_3, %c0_4] : memref<1x96xf32, #tpu.memory_space<vmem>>, vector<1x96xf32>
    %7 = vector.broadcast %6 : vector<1x96xf32> to vector<56x96xf32>
    %8 = arith.mulf %5, %7 : vector<56x96xf32>
    %9 = math.exp %8 : vector<56x96xf32>
    %c0_5 = arith.constant 0 : index
    %c0_6 = arith.constant 0 : index
    %10 = vector.load %arg5[%c0_5, %c0_6] : memref<56x96xf32, #tpu.memory_space<vmem>>, vector<56x96xf32>
    tpu.vector_store %arg5[%c0_5, %c0_6], %9 {strides = array<i32>} : memref<56x96xf32, #tpu.memory_space<vmem>>, vector<56x96xf32>,
    return
  }
  func.func @transform_0(%arg0: i32, %arg1: i32) -> (i32, i32) {
    %c0_i32 = arith.constant 0 : i32
    %c0_i32_0 = arith.constant 0 : i32
    return %arg0, %c0_i32 : i32, i32
  }
  func.func @transform_1(%arg0: i32, %arg1: i32) -> (i32, i32) {
    %c0_i32 = arith.constant 0 : i32
    %c0_i32_0 = arith.constant 0 : i32
    return %c0_i32, %arg1 : i32, i32
  }
  func.func @transform_2(%arg0: i32, %arg1: i32) -> (i32, i32) {
    %c0_i32 = arith.constant 0 : i32
    %c0_i32_0 = arith.constant 0 : i32
    return %c0_i32, %arg1 : i32, i32
  }
  func.func @transform_3(%arg0: i32, %arg1: i32) -> (i32, i32) {
    %c0_i32 = arith.constant 0 : i32
    return %arg0, %arg1 : i32, i32
  }
}

</mosaic_0001>

<llo_original>
// kernel: rbf_forward.1
$region0: #{rbf_forward.1}
  #allocation0 [shape = 'u32[]', space=smem, size = 0x4, offset = 0x4, fixed_abs, tag = 'smem constant byte address 0x4 - core index']
  #allocation1 [shape = 'u32[144,128]{1,0:T(1,128)}', space=vmem, size = 0x12000, scoped, tag = 'internal scratch']
  %s0 = inlined_call_operand.vmem [shape: f32[100,1], index: 0, kind: input, shape index: {}]
  %s1 = inlined_call_operand.vmem [shape: f32[1,96], index: 1, kind: input, shape index: {}]
  %s2 = inlined_call_operand.vmem [shape: f32[1,96], index: 2, kind: input, shape index: {}]
  %s3 = inlined_call_operand.vmem [shape: f32[100,96], index: 3, kind: output, shape index: {}]
  %s4 = sld [smem:[#allocation0]]
  $region93: #{rbf_forward.1} parent=0
    _
  %s6 = ssub.s32 1, %s4
  %s7 = scalar_select 0, %s6, %s4
  $region1: #{rbf_forward.1} parent=0
    #allocation2 [shape = 'u8[57344]{0}', space=vmem, size = 0xe000, scoped, tag = 'output window, operand 0']
    loop: start=0, step=1, limit=4
    $region2: #{rbf_forward.1} parent=1 // loop_pre_header
      _
    $region3: #{rbf_forward.1} parent=1 // loop_header
      %s9 = sphi 0, %s13
      %p10 = scmp.ge.s32.totalorder %s9, 4
      %s16 = sphi 0, %s28
      %s17 = sphi 0, %s24
      %s18 = sphi 0, %s16
      %s19 = sphi 0, %s17
      %s20 = sphi 0, %s18
      %s21 = sphi 0, %s19
      %s31 = sphi 0, %s33
      %s34 = sphi 0, %s31
      %s35 = sphi 0, %s34
      %s51 = sphi 0, %s35
      %s57 = sphi 0, %s59
      %s60 = sphi 0, %s57
      %s61 = sphi 0, %s60
      %s77 = sphi 0, %s61
      %s83 = sphi 0, %s85
      %s86 = sphi 0, %s83
      %s87 = sphi 0, %s86
      %s103 = sphi 0, %s87
      %s111 = sphi 0, %s113
      %s114 = sphi 0, %s111
      %s115 = sphi 0, %s114
      %s131 = sphi 0, %s115
    $region4: #{rbf_forward.1} parent=1 // loop_header_branch
      %12 = sbr.rel (%p10) target = $region8
    $region5: #{rbf_forward.1} parent=1 // loop_body
      %s14 = ssub.s32 %s9, 1
      %s15 = ssub.s32 %s9, 2
      %s22 = sadd.s32 1, %s17
      %p23 = scmp.ge.s32.totalorder %s22, 1
      %s24 = scalar_select %p23, 0, %s22
      %s25 = sadd.s32 1, %s16
      %s26 = scalar_select %p23, %s25, %s16
      %p27 = scmp.ge.s32.totalorder %s26, 2
      %s28 = scalar_select %p27, 0, %s26
      %s29 = ssub.s32 %s16, %s28
      %p30 = scmp.eq.s32.totalorder %s29, 0
      %s32 = sadd.s32 %s31, 1
      %s33 = scalar_select %p30, %s31, %s32
      %p36 = pneg %p30
      %p37 = scmp.eq.s32.totalorder %s9, 1
      %p38 = por %p36, %p37
      %p39 = scmp.ne.s32.totalorder %s31, %s34
      %p40 = scmp.eq.s32.totalorder %s9, 0
      %p41 = por %p39, %p40
      %p42 = scmp.ne.s32.totalorder %s31, %s34
      %p43 = scmp.eq.s32.totalorder %s14, 1
      %p44 = por %p42, %p43
      %p45 = scmp.ne.s32.totalorder %s34, %s35
      %p46 = scmp.eq.s32.totalorder %s14, 0
      %p47 = por %p45, %p46
      %p48 = scmp.ne.s32.totalorder %s34, %s35
      %p49 = scmp.eq.s32.totalorder %s15, 1
      %p50 = por %p48, %p49
      %p52 = scmp.ne.s32.totalorder %s35, %s51
      %p53 = scmp.eq.s32.totalorder %s15, 0
      %p54 = por %p52, %p53
      %s55 = ssub.s32 %s17, %s24
      %p56 = scmp.eq.s32.totalorder %s55, 0
      %s58 = sadd.s32 %s57, 1
      %s59 = scalar_select %p56, %s57, %s58
      %p62 = pneg %p56
      %p63 = scmp.eq.s32.totalorder %s9, 1
      %p64 = por %p62, %p63
      %p65 = scmp.ne.s32.totalorder %s57, %s60
      %p66 = scmp.eq.s32.totalorder %s9, 0
      %p67 = por %p65, %p66
      %p68 = scmp.ne.s32.totalorder %s57, %s60
      %p69 = scmp.eq.s32.totalorder %s14, 1
      %p70 = por %p68, %p69
      %p71 = scmp.ne.s32.totalorder %s60, %s61
      %p72 = scmp.eq.s32.totalorder %s14, 0
      %p73 = por %p71, %p72
      %p74 = scmp.ne.s32.totalorder %s60, %s61
      %p75 = scmp.eq.s32.totalorder %s15, 1
      %p76 = por %p74, %p75
      %p78 = scmp.ne.s32.totalorder %s61, %s77
      %p79 = scmp.eq.s32.totalorder %s15, 0
      %p80 = por %p78, %p79
      %s81 = ssub.s32 %s17, %s24
      %p82 = scmp.eq.s32.totalorder %s81, 0
      %s84 = sadd.s32 %s83, 1
      %s85 = scalar_select %p82, %s83, %s84
      %p88 = pneg %p82
      %p89 = scmp.eq.s32.totalorder %s9, 1
      %p90 = por %p88, %p89
      %p91 = scmp.ne.s32.totalorder %s83, %s86
      %p92 = scmp.eq.s32.totalorder %s9, 0
      %p93 = por %p91, %p92
      %p94 = scmp.ne.s32.totalorder %s83, %s86
      %p95 = scmp.eq.s32.totalorder %s14, 1
      %p96 = por %p94, %p95
      %p97 = scmp.ne.s32.totalorder %s86, %s87
      %p98 = scmp.eq.s32.totalorder %s14, 0
      %p99 = por %p97, %p98
      %p100 = scmp.ne.s32.totalorder %s86, %s87
      %p101 = scmp.eq.s32.totalorder %s15, 1
      %p102 = por %p100, %p101
      %p104 = scmp.ne.s32.totalorder %s87, %s103
      %p105 = scmp.eq.s32.totalorder %s15, 0
      %p106 = por %p104, %p105
      %s107 = ssub.s32 %s16, %s28
      %s108 = ssub.s32 %s17, %s24
      %s109 = sor.u32 %s107, %s108
      %p110 = scmp.eq.s32.totalorder %s109, 0
      %s112 = sadd.s32 %s111, 1
      %s113 = scalar_select %p110, %s111, %s112
      %p116 = pneg %p110
      %p117 = scmp.eq.s32.totalorder %s9, 1
      %p118 = por %p116, %p117
      %p119 = scmp.ne.s32.totalorder %s111, %s114
      %p120 = scmp.eq.s32.totalorder %s9, 0
      %p121 = por %p119, %p120
      %p122 = scmp.ne.s32.totalorder %s111, %s114
      %p123 = scmp.eq.s32.totalorder %s14, 1
      %p124 = por %p122, %p123
      %p125 = scmp.ne.s32.totalorder %s114, %s115
      %p126 = scmp.eq.s32.totalorder %s14, 0
      %p127 = por %p125, %p126
      %p128 = scmp.ne.s32.totalorder %s114, %s115
      %p129 = scmp.eq.s32.totalorder %s15, 1
      %p130 = por %p128, %p129
      %p132 = scmp.ne.s32.totalorder %s115, %s131
      %p133 = scmp.eq.s32.totalorder %s15, 0
      %p134 = por %p132, %p133
      %p135 = scmp.le.s32.totalorder 1, %s9
      %p136 = scmp.lt.s32.totalorder %s9, 3
      %p137 = pnand %p135, %p136
      %p138 = pneg %p137
      // Predicated region
      $region9: #{rbf_forward.1} parent=5 // pred_check
        _
      $region10: #{rbf_forward.1} parent=5 // pred_check_branch
        %140 = sbr.rel (%p137) target = $region12
      $region11: #{rbf_forward.1} parent=5 // pred_region
        %s141 = ssub.s32 %s9, 1
        // Predicated region
        $region13: #{rbf_forward.1} parent=11 // pred_check
          %p142 = pneg %p73
        $region14: #{rbf_forward.1} parent=11 // pred_check_branch
          %144 = sbr.rel (%p142) target = $region16
        $region15: #{rbf_forward.1} parent=11 // pred_region
          %p145 = scmp.lt.s32.totalorder %s19, 0
          %s146 = scalar_select %p145, %s19, 0
          %s147 = scalar_lea.vmem %s1, %s146
        $region16: #{rbf_forward.1} parent=11 // pred_fallthru
          _
        // Predicated region
        $region17: #{rbf_forward.1} parent=11 // pred_check
          %p148 = pneg %p99
        $region18: #{rbf_forward.1} parent=11 // pred_check_branch
          %150 = sbr.rel (%p148) target = $region20
        $region19: #{rbf_forward.1} parent=11 // pred_region
          %p151 = scmp.lt.s32.totalorder %s19, 0
          %s152 = scalar_select %p151, %s19, 0
          %s153 = scalar_lea.vmem %s2, %s152
        $region20: #{rbf_forward.1} parent=11 // pred_fallthru
          _
      $region12: #{rbf_forward.1} parent=5 // pred_fallthru
        _
      %p154 = scmp.lt.s32.totalorder %s9, 2
      // Predicated region
      $region21: #{rbf_forward.1} parent=5 // pred_check
        %p155 = pneg %p154
      $region22: #{rbf_forward.1} parent=5 // pred_check_branch
        %157 = sbr.rel (%p155) target = $region24
      $region23: #{rbf_forward.1} parent=5 // pred_region
        // Predicated region
        $region25: #{rbf_forward.1} parent=23 // pred_check
          %p158 = pneg %p41
        $region26: #{rbf_forward.1} parent=23 // pred_check_branch
          %160 = sbr.rel (%p158) target = $region28
        $region27: #{rbf_forward.1} parent=23 // pred_region
          %s161 = smul.u32 7, %s16
          %s162 = ssub.s32 13, %s161
          %p163 = scmp.lt.s32.totalorder %s162, 7
          %s164 = scalar_select %p163, %s162, 7
          %s165 = smul.u32 128, %s164
          %p166 = scmp.lt.s32.totalorder %s161, 12
          %s167 = scalar_select %p166, %s161, 12
          %s168 = smul.addr %s167, 8
          %s169 = scalar_lea.vmem %s0, %s168
          %s170 = smul.u32 7, %s16
          %s171 = ssub.s32 13, %s170
          %p172 = scmp.lt.s32.totalorder %s171, 7
          %s173 = scalar_select %p172, %s171, 7
          %s174 = smul.u32 128, %s173
        $region28: #{rbf_forward.1} parent=23 // pred_fallthru
          _
      $region24: #{rbf_forward.1} parent=5 // pred_fallthru
        _
      %p175 = scmp.le.s32.totalorder 1, %s9
      %p176 = scmp.lt.s32.totalorder %s9, 3
      %p177 = pnand %p175, %p176
      %p178 = pneg %p177
      // Predicated region
      $region29: #{rbf_forward.1} parent=5 // pred_check
        _
      $region30: #{rbf_forward.1} parent=5 // pred_check_branch
        %180 = sbr.rel (%p177) target = $region32
      $region31: #{rbf_forward.1} parent=5 // pred_region
        %s181 = ssub.s32 %s9, 1
        %s182 = smul.u32 7, %s18
        %s183 = ssub.s32 13, %s182
        %p184 = scmp.lt.s32.totalorder %s183, 7
        %s185 = scalar_select %p184, %s183, 7
        %s186 = smul.u32 128, %s185
        %p187 = scmp.lt.s32.totalorder %s182, 12
        %s188 = scalar_select %p187, %s182, 12
        %s189 = smul.addr %s188, 8
        %s190 = scalar_lea.vmem %s0, %s189
        %p191 = pneg %p47
        %p192 = pneg %p44
        %p193 = scmp.lt.s32.totalorder %s19, 0
        %s194 = scalar_select %p193, %s19, 0
        %s195 = scalar_lea.vmem %s1, %s194
        %p196 = pneg %p73
        %p197 = pneg %p70
        %p198 = scmp.lt.s32.totalorder %s19, 0
        %s199 = scalar_select %p198, %s19, 0
        %s200 = scalar_lea.vmem %s2, %s199
        %p201 = pneg %p99
        %p202 = pneg %p96
        %p203 = pneg %p127
        %p204 = pneg %p124
        %s205 = sand.u32 %s114, 1
        %s206 = sand.u32 %s114, 1
        %s207 = smul.addr %s206, 56
        %s208 = scalar_lea.vmem [#allocation2], %s207
        %s209 = smul.u32 7, %s18
        %s210 = ssub.s32 13, %s209
        %p211 = scmp.lt.s32.totalorder %s210, 7
        %s212 = scalar_select %p211, %s210, 7
        %s213 = smul.u32 128, %s212
        %p214 = scmp.lt.s32.totalorder %s209, 12
        %s215 = scalar_select %p214, %s209, 12
        %s216 = smul.addr %s215, 8
        %s217 = scalar_lea.vmem %s0, %s216
        %s218 = smul.u32 7, %s18
        %s219 = ssub.s32 13, %s218
        %p220 = scmp.lt.s32.totalorder %s219, 7
        %s221 = scalar_select %p220, %s219, 7
        %s222 = smul.u32 128, %s221
        %p223 = scmp.lt.s32.totalorder %s19, 0
        %s224 = scalar_select %p223, %s19, 0
        %s225 = scalar_lea.vmem %s1, %s224
        %p226 = scmp.lt.s32.totalorder %s19, 0
        %s227 = scalar_select %p226, %s19, 0
        %s228 = scalar_lea.vmem %s2, %s227
        %s229 = smul.u32 7, %s18
        %s230 = ssub.s32 13, %s229
        %p231 = scmp.lt.s32.totalorder %s230, 7
        %s232 = scalar_select %p231, %s230, 7
        %s233 = smul.u32 128, %s232
        %v234 = vld [vmem:[%s217] sm:$0xff]
        %v235 = vld [vmem:[%s217 + $0x8] sm:$0xff]
        %v236 = vld [vmem:[%s217 + $0x10] sm:$0xff]
        %v237 = vld [vmem:[%s217 + $0x18] sm:$0xff]
        %v238 = vld [vmem:[%s217 + $0x20] sm:$0xff]
        %v239 = vld [vmem:[%s217 + $0x28] sm:$0xff]
        %v240 = vld [vmem:[%s217 + $0x30] sm:$0xff]
        %v241 = vld [vmem:[%s225] sm:$0x1]
        %243 = vset.pattern.permute.xlu0 0
        %244 = vperm.xlu0 %243, %v234
        %v245 = vpop.permute.xlu0 %244
        %248 = vset.pattern.permute.xlu0 0
        %249 = vperm.xlu0 %248, %v235
        %v250 = vpop.permute.xlu0 %249
        %253 = vset.pattern.permute.xlu0 0
        %254 = vperm.xlu0 %253, %v236
        %v255 = vpop.permute.xlu0 %254
        %258 = vset.pattern.permute.xlu0 0
        %259 = vperm.xlu0 %258, %v237
        %v260 = vpop.permute.xlu0 %259
        %263 = vset.pattern.permute.xlu0 0
        %264 = vperm.xlu0 %263, %v238
        %v265 = vpop.permute.xlu0 %264
        %268 = vset.pattern.permute.xlu0 0
        %269 = vperm.xlu0 %268, %v239
        %v270 = vpop.permute.xlu0 %269
        %273 = vset.pattern.permute.xlu0 0
        %274 = vperm.xlu0 %273, %v240
        %v275 = vpop.permute.xlu0 %274
        %v278 = vlaneseq
        %v279 = vshrl.u32 %v278, 7
        %v280 = vsub.s32 0, %v279
        %v281 = vrot.slane %v241, %v280
        %v283 = vsub.f32 %v245, %v281
        %v284 = vsub.f32 %v250, %v281
        %v285 = vsub.f32 %v255, %v281
        %v286 = vsub.f32 %v260, %v281
        %v287 = vsub.f32 %v265, %v281
        %v288 = vsub.f32 %v270, %v281
        %v289 = vsub.f32 %v275, %v281
        %v290 = vmul.f32 %v283, %v283
        %v291 = vmul.f32 %v284, %v284
        %v292 = vmul.f32 %v285, %v285
        %v293 = vmul.f32 %v286, %v286
        %v294 = vmul.f32 %v287, %v287
        %v295 = vmul.f32 %v288, %v288
        %v296 = vmul.f32 %v289, %v289
        %v297 = vld [vmem:[%s228] sm:$0x1]
        %v299 = vlaneseq
        %v300 = vshrl.u32 %v299, 7
        %v301 = vsub.s32 0, %v300
        %v302 = vrot.slane %v297, %v301
        %v304 = vmul.f32 %v290, %v302
        %v305 = vmul.f32 %v291, %v302
        %v306 = vmul.f32 %v292, %v302
        %v307 = vmul.f32 %v293, %v302
        %v308 = vmul.f32 %v294, %v302
        %v309 = vmul.f32 %v295, %v302
        %v310 = vmul.f32 %v296, %v302
        %v311 = vmul.f32 %v304, 1.442695
        %v312 = vpow.pop %v311
        %v313 = vmul.f32 %v305, 1.442695
        %v314 = vpow.pop %v313
        %v315 = vmul.f32 %v306, 1.442695
        %v316 = vpow.pop %v315
        %v317 = vmul.f32 %v307, 1.442695
        %v318 = vpow.pop %v317
        %v319 = vmul.f32 %v308, 1.442695
        %v320 = vpow.pop %v319
        %v321 = vmul.f32 %v309, 1.442695
        %v322 = vpow.pop %v321
        %v323 = vmul.f32 %v310, 1.442695
        %v324 = vpow.pop %v323
        %vm325 = vcmask 785408
        %326 = vst.msk [vmem:[%s208] sm:$0xff] %vm325, %v312
        %327 = vst.msk [vmem:[%s208 + $0x8] sm:$0xff] %vm325, %v314
        %328 = vst.msk [vmem:[%s208 + $0x10] sm:$0xff] %vm325, %v316
        %329 = vst.msk [vmem:[%s208 + $0x18] sm:$0xff] %vm325, %v318
        %330 = vst.msk [vmem:[%s208 + $0x20] sm:$0xff] %vm325, %v320
        %331 = vst.msk [vmem:[%s208 + $0x28] sm:$0xff] %vm325, %v322
        %332 = vst.msk [vmem:[%s208 + $0x30] sm:$0xff] %vm325, %v324
        %s333 = sand.u32 %s114, 1
        %s334 = sand.u32 %s114, 1
        %s335 = smul.addr %s334, 56
        %s336 = scalar_lea.vmem [#allocation2], %s335
        // Predicated region
        $region33: #{rbf_forward.1} parent=31 // pred_check
          %p337 = pneg %p124
        $region34: #{rbf_forward.1} parent=31 // pred_check_branch
          %339 = sbr.rel (%p337) target = $region36
        $region35: #{rbf_forward.1} parent=31 // pred_region
          %s340 = smul.u32 7, %s18
          %s341 = ssub.s32 13, %s340
          %p342 = scmp.lt.s32.totalorder %s341, 7
          %s343 = scalar_select %p342, %s341, 7
          %s344 = smul.u32 128, %s343
          %p345 = scmp.ne.s32.totalorder 0, %s344
          %s346 = sadd.s32 %s19, %s340
          %s347 = smul.addr %s346, 8
          %s348 = scalar_lea.vmem %s3, %s347
          // Predicated region
          $region37: #{rbf_forward.1} parent=35 // pred_check
            %p349 = pneg %p345
          $region38: #{rbf_forward.1} parent=35 // pred_check_branch
            %351 = sbr.rel (%p349) target = $region40
          $region39: #{rbf_forward.1} parent=35 // pred_region
            // Predicated region
            $region41: #{rbf_forward.1} parent=39 // pred_check
              _
            $region42: #{rbf_forward.1} parent=39 // pred_check_branch
              %353 = sbr.rel (0) target = $region44
            $region43: #{rbf_forward.1} parent=39 // pred_region
              // Predicated region
              $region63: #{rbf_forward.1} parent=43 // pred_check
                _
              $region64: #{rbf_forward.1} parent=43 // pred_check_branch
                %415 = sbr.rel (0) target = $region66
              $region65: #{rbf_forward.1} parent=43 // pred_region
                %s416 = sdiv.u32.pop %s343, 7
                %s417 = srem.u32.pop %s343, 7
                // While loop
                $region67: #{rbf_forward.1} parent=65 // loop_pre_header
                  _
                $region68: #{rbf_forward.1} parent=65 // loop_header
                  %s419 = sphi 0, %s421
                  %p420 = scmp.ge.s32.totalorder %s419, %s416
                  %s424 = sphi 0, %s443
                  %s425 = sphi %s336, %s446
                  %s426 = sphi %s348, %s447
                $region69: #{rbf_forward.1} parent=65 // loop_header_branch
                  %423 = sbr.rel (%p420) target = $region73
                $region70: #{rbf_forward.1} parent=65 // loop_body
                  %v427 = vld [vmem:[%s425] sm:$0xff]
                  %428 = vst [vmem:[%s426] sm:$0xff] %v427
                  %v429 = vld [vmem:[%s425 + $0x8] sm:$0xff]
                  %430 = vst [vmem:[%s426 + $0x8] sm:$0xff] %v429
                  %v431 = vld [vmem:[%s425 + $0x10] sm:$0xff]
                  %432 = vst [vmem:[%s426 + $0x10] sm:$0xff] %v431
                  %v433 = vld [vmem:[%s425 + $0x18] sm:$0xff]
                  %434 = vst [vmem:[%s426 + $0x18] sm:$0xff] %v433
                  %v435 = vld [vmem:[%s425 + $0x20] sm:$0xff]
                  %436 = vst [vmem:[%s426 + $0x20] sm:$0xff] %v435
                  %v437 = vld [vmem:[%s425 + $0x28] sm:$0xff]
                  %438 = vst [vmem:[%s426 + $0x28] sm:$0xff] %v437
                  %v439 = vld [vmem:[%s425 + $0x30] sm:$0xff]
                  %440 = vst [vmem:[%s426 + $0x30] sm:$0xff] %v439
                  %s441 = sadd.s32 1, %s424
                  %p442 = scmp.ge.s32.totalorder %s441, %s416
                  %s443 = scalar_select %p442, 0, %s441
                  %s444 = smul.u32 %s443, 56
                  %s445 = smul.u32 %s443, 56
                  %s446 = scalar_lea.vmem %s336, %s444 [#allocation2]
                  %s447 = scalar_lea.vmem %s348, %s445
                $region71: #{rbf_forward.1} parent=65 // loop_footer
                  %s421 = sadd.s32 %s419, 1
                $region72: #{rbf_forward.1} parent=65 // loop_footer_branch
                  %418 = sbr.rel target = $region68
                $region73: #{rbf_forward.1} parent=65 // loop_exit
                  _
                %s448 = sdiv.u32.pop %s343, 7
                %s449 = srem.u32.pop %s343, 7
                %s450 = smul.u32 %s448, 7
                %s451 = smul.u32 8, %s450
                %s452 = scalar_lea.vmem %s336, %s451 [#allocation2]
                %s453 = smul.u32 8, %s450
                %s454 = scalar_lea.vmem %s348, %s453
                // While loop
                $region74: #{rbf_forward.1} parent=65 // loop_pre_header
                  _
                $region75: #{rbf_forward.1} parent=65 // loop_header
                  %s456 = sphi 0, %s458
                  %p457 = scmp.ge.s32.totalorder %s456, %s449
                  %s461 = sphi 0, %s468
                  %s462 = sphi %s452, %s471
                  %s463 = sphi %s454, %s472
                $region76: #{rbf_forward.1} parent=65 // loop_header_branch
                  %460 = sbr.rel (%p457) target = $region80
                $region77: #{rbf_forward.1} parent=65 // loop_body
                  %v464 = vld [vmem:[%s462] sm:$0xff]
                  %465 = vst [vmem:[%s463] sm:$0xff] %v464
                  %s466 = sadd.s32 1, %s461
                  %p467 = scmp.ge.s32.totalorder %s466, %s449
                  %s468 = scalar_select %p467, 0, %s466
                  %s469 = smul.u32 %s468, 8
                  %s470 = smul.u32 %s468, 8
                  %s471 = scalar_lea.vmem %s452, %s469 [#allocation2]
                  %s472 = scalar_lea.vmem %s454, %s470
                $region78: #{rbf_forward.1} parent=65 // loop_footer
                  %s458 = sadd.s32 %s456, 1
                $region79: #{rbf_forward.1} parent=65 // loop_footer_branch
                  %455 = sbr.rel target = $region75
                $region80: #{rbf_forward.1} parent=65 // loop_exit
                  _
              $region66: #{rbf_forward.1} parent=43 // pred_fallthru
                _
              // Predicated region
              $region81: #{rbf_forward.1} parent=43 // pred_check
                _
              $region82: #{rbf_forward.1} parent=43 // pred_check_branch
                %474 = sbr.rel target = $region84
              $region83: #{rbf_forward.1} parent=43 // pred_region
                _
              $region84: #{rbf_forward.1} parent=43 // pred_fallthru
                _
            $region44: #{rbf_forward.1} parent=39 // pred_fallthru
              _
            // Predicated region
            $region45: #{rbf_forward.1} parent=39 // pred_check
              _
            $region46: #{rbf_forward.1} parent=39 // pred_check_branch
              %355 = sbr.rel target = $region48
            $region47: #{rbf_forward.1} parent=39 // pred_region
              %s357 = sdiv.u32.pop %s343, 7
              %s358 = srem.u32.pop %s343, 7
              // While loop
              $region49: #{rbf_forward.1} parent=47 // loop_pre_header
                _
              $region50: #{rbf_forward.1} parent=47 // loop_header
                %s360 = sphi 0, %s362
                %p361 = scmp.ge.s32.totalorder %s360, %s357
                %s365 = sphi 0, %s384
                %s366 = sphi %s336, %s387
                %s367 = sphi %s348, %s388
              $region51: #{rbf_forward.1} parent=47 // loop_header_branch
                %364 = sbr.rel (%p361) target = $region55
              $region52: #{rbf_forward.1} parent=47 // loop_body
                %v368 = vld [vmem:[%s366] sm:$0xff]
                %369 = vst [vmem:[%s367] sm:$0xff] %v368
                %v370 = vld [vmem:[%s366 + $0x8] sm:$0xff]
                %371 = vst [vmem:[%s367 + $0x8] sm:$0xff] %v370
                %v372 = vld [vmem:[%s366 + $0x10] sm:$0xff]
                %373 = vst [vmem:[%s367 + $0x10] sm:$0xff] %v372
                %v374 = vld [vmem:[%s366 + $0x18] sm:$0xff]
                %375 = vst [vmem:[%s367 + $0x18] sm:$0xff] %v374
                %v376 = vld [vmem:[%s366 + $0x20] sm:$0xff]
                %377 = vst [vmem:[%s367 + $0x20] sm:$0xff] %v376
                %v378 = vld [vmem:[%s366 + $0x28] sm:$0xff]
                %379 = vst [vmem:[%s367 + $0x28] sm:$0xff] %v378
                %v380 = vld [vmem:[%s366 + $0x30] sm:$0xff]
                %381 = vst [vmem:[%s367 + $0x30] sm:$0xff] %v380
                %s382 = sadd.s32 1, %s365
                %p383 = scmp.ge.s32.totalorder %s382, %s357
                %s384 = scalar_select %p383, 0, %s382
                %s385 = smul.u32 %s384, 56
                %s386 = smul.u32 %s384, 56
                %s387 = scalar_lea.vmem %s336, %s385 [#allocation2]
                %s388 = scalar_lea.vmem %s348, %s386
              $region53: #{rbf_forward.1} parent=47 // loop_footer
                %s362 = sadd.s32 %s360, 1
              $region54: #{rbf_forward.1} parent=47 // loop_footer_branch
                %359 = sbr.rel target = $region50
              $region55: #{rbf_forward.1} parent=47 // loop_exit
                _
              %s389 = sdiv.u32.pop %s343, 7
              %s390 = srem.u32.pop %s343, 7
              %s391 = smul.u32 %s389, 7
              %s392 = smul.u32 8, %s391
              %s393 = scalar_lea.vmem %s336, %s392 [#allocation2]
              %s394 = smul.u32 8, %s391
              %s395 = scalar_lea.vmem %s348, %s394
              // While loop
              $region56: #{rbf_forward.1} parent=47 // loop_pre_header
                _
              $region57: #{rbf_forward.1} parent=47 // loop_header
                %s397 = sphi 0, %s399
                %p398 = scmp.ge.s32.totalorder %s397, %s390
                %s402 = sphi 0, %s409
                %s403 = sphi %s393, %s412
                %s404 = sphi %s395, %s413
              $region58: #{rbf_forward.1} parent=47 // loop_header_branch
                %401 = sbr.rel (%p398) target = $region62
              $region59: #{rbf_forward.1} parent=47 // loop_body
                %v405 = vld [vmem:[%s403] sm:$0xff]
                %406 = vst [vmem:[%s404] sm:$0xff] %v405
                %s407 = sadd.s32 1, %s402
                %p408 = scmp.ge.s32.totalorder %s407, %s390
                %s409 = scalar_select %p408, 0, %s407
                %s410 = smul.u32 %s409, 8
                %s411 = smul.u32 %s409, 8
                %s412 = scalar_lea.vmem %s393, %s410 [#allocation2]
                %s413 = scalar_lea.vmem %s395, %s411
              $region60: #{rbf_forward.1} parent=47 // loop_footer
                %s399 = sadd.s32 %s397, 1
              $region61: #{rbf_forward.1} parent=47 // loop_footer_branch
                %396 = sbr.rel target = $region57
              $region62: #{rbf_forward.1} parent=47 // loop_exit
                _
            $region48: #{rbf_forward.1} parent=39 // pred_fallthru
              _
          $region40: #{rbf_forward.1} parent=35 // pred_fallthru
            _
          %475 = vnop
        $region36: #{rbf_forward.1} parent=31 // pred_fallthru
          _
      $region32: #{rbf_forward.1} parent=5 // pred_fallthru
        _
      %p476 = scmp.le.s32.totalorder 2, %s9
      // Predicated region
      $region85: #{rbf_forward.1} parent=5 // pred_check
        %p477 = pneg %p476
      $region86: #{rbf_forward.1} parent=5 // pred_check_branch
        %479 = sbr.rel (%p477) target = $region88
      $region87: #{rbf_forward.1} parent=5 // pred_region
        %s480 = ssub.s32 %s9, 2
        // Predicated region
        $region89: #{rbf_forward.1} parent=87 // pred_check
          %p481 = pneg %p130
        $region90: #{rbf_forward.1} parent=87 // pred_check_branch
          %483 = sbr.rel (%p481) target = $region92
        $region91: #{rbf_forward.1} parent=87 // pred_region
          %s484 = sand.u32 %s115, 1
          %s485 = sand.u32 %s115, 1
          %s486 = smul.addr %s485, 56
          %s487 = scalar_lea.vmem [#allocation2], %s486
        $region92: #{rbf_forward.1} parent=87 // pred_fallthru
          _
      $region88: #{rbf_forward.1} parent=5 // pred_fallthru
        _
    $region6: #{rbf_forward.1} parent=1 // loop_footer
      %s13 = sadd.s32 1, %s9
    $region7: #{rbf_forward.1} parent=1 // loop_footer_branch
      %8 = sbr.rel target = $region3
    $region8: #{rbf_forward.1} parent=1 // loop_exit
      _

</llo_original>
